<compile_context>
chip_gen: v5e
topology: v5e:2x2
jax: 0.10.0
libtpu: 0.0.40
codegen_flags: <defaults>
</compile_context>

<pallas_src>
import functools
import math

import jax
import jax.numpy as jnp
import numpy as np
from jax import lax
from jax.experimental import pallas as pl
from jax.experimental.pallas import tpu as pltpu


# ----------------------------------------------------------------------------
# Prologue: fused k/v projections (outputs are also the returned kv cache).
# ----------------------------------------------------------------------------
def _kv_proj_kernel(x_ref, wk_ref, bk_ref, wv_ref, bv_ref, k_ref, v_ref):
    xb = x_ref[0]                                                    # (ts, dim)
    k = jnp.dot(xb, wk_ref[...], preferred_element_type=jnp.float32) + bk_ref[...]
    v = jnp.dot(xb, wv_ref[...], preferred_element_type=jnp.float32) + bv_ref[...]
    k_ref[0] = k.astype(k_ref.dtype)
    v_ref[0] = v.astype(v_ref.dtype)


# ----------------------------------------------------------------------------
# Main fused attention kernel: q proj -> flash causal attention -> out proj.
# ----------------------------------------------------------------------------
def _mqa_attn_kernel(x_ref, wq_ref, bq_ref, k_ref, v_ref, wo_ref, bo_ref,
                     out_ref, *, n_heads, head_dim, q_tile, kv_tile,
                     approx_recip):
    H, D, TQ, TKV = n_heads, head_dim, q_tile, kv_tile
    R = H * TQ
    qi = pl.program_id(1)
    cdt = wq_ref.dtype
    q_start = pl.multiple_of(qi * TQ, TQ)

    # ---- fused q projection for this query tile; 1/sqrt(D) folded into q.
    xq = x_ref[0]                                                    # (TQ, dim)
    q = jnp.dot(xq, wq_ref[...], preferred_element_type=jnp.float32) + bq_ref[...]
    q = (q * (1.0 / math.sqrt(D))).astype(cdt)                       # (TQ, H*D)
    # Token-major head fold (row r = t*H + h): pure reshape, no concat/transpose.
    q_r = q.reshape(R, D)                                            # (H*TQ, D)

    def kv_step(c, carry, masked):
        m, l, acc = carry
        kv_start = pl.multiple_of(c * TKV, TKV)
        kc = k_ref[0, pl.ds(kv_start, TKV), :].astype(cdt)           # (TKV, D)
        vc = v_ref[0, pl.ds(kv_start, TKV), :].astype(cdt)           # (TKV, D)
        # NT contraction (contract last dims of both) -> no k^T materialization.
        s = lax.dot_general(q_r, kc, (((1,), (1,)), ((), ())),
                            preferred_element_type=jnp.float32)      # (R, TKV)
        if masked:
            # keep iff kv_start+kk <= q_start + r//H  <=>  r >= H*(kk + kv_start - q_start)
            r_idx = lax.broadcasted_iota(jnp.int32, (R, TKV), 0)
            k_idx = lax.broadcasted_iota(jnp.int32, (R, TKV), 1)
            keep = r_idx >= H * (k_idx + (kv_start - q_start))
            s = jnp.where(keep, s, -jnp.inf)
        m_new = jnp.maximum(m, jnp.max(s, axis=-1, keepdims=True))
        alpha = jnp.exp(m - m_new)
        p = jnp.exp(s - m_new)
        l_new = alpha * l + jnp.sum(p, axis=-1, keepdims=True)
        acc_new = alpha * acc + jnp.dot(p.astype(cdt), vc,
                                        preferred_element_type=jnp.float32)
        return m_new, l_new, acc_new

    n_diag = TQ // TKV                 # chunks overlapping this q tile (masked)
    n_full = qi * n_diag               # strictly-causal prefix chunks (no mask)
    carry = (jnp.full((R, 1), -jnp.inf, jnp.float32),
             jnp.zeros((R, 1), jnp.float32),
             jnp.zeros((R, D), jnp.float32))
    carry = lax.fori_loop(0, n_full, lambda c, cr: kv_step(c, cr, False), carry)
    for d in range(n_diag):            # static unroll; mask only on the diagonal
        carry = kv_step(n_full + d, carry, True)
    _, l, acc = carry

    # Normalization folded into the small (R, D) context tile.
    ctx = (acc * pl.reciprocal(l, approx=approx_recip)).astype(cdt)
    ctx = ctx.reshape(TQ, H * D)       # inverse head fold: pure reshape
    out = jnp.dot(ctx, wo_ref[...], preferred_element_type=jnp.float32) + bo_ref[...]
    out_ref[0] = out.astype(out_ref.dtype)


# ----------------------------------------------------------------------------
# Wrapper
# ----------------------------------------------------------------------------
def _pick_q_tile(seq_len, n_heads):
    """Largest divisor of seq_len (multiple of 8, or seq_len itself) that keeps
    n_heads * q_tile in the ~256-512 MXU-row range."""
    target = max(8, min(512 // max(n_heads, 1), 256))
    cands = [d for d in range(1, seq_len + 1)
             if seq_len % d == 0 and (d % 8 == 0 or d == seq_len)]
    fits = [d for d in cands if d <= target]
    return max(fits) if fits else min(cands)


def mqa_forward(x, params, n_heads, head_dim, start_pos=0,
                k_cache=None, v_cache=None, *,
                q_tile=None, kv_tile=None,
                compute_dtype=jnp.bfloat16, out_dtype=None):
    # TODO(synk): k_cache/v_cache concatenation path is not implemented.
    assert k_cache is None and v_cache is None
    del start_pos  # unused by the PyTorch forward as well

    B, T, dim = x.shape
    H, D = n_heads, head_dim
    hd = H * D
    wq, bq, wk, bk, wv, bv, wo, bo = params
    if out_dtype is None:
        out_dtype = x.dtype
    cdt = jnp.dtype(compute_dtype)

    if q_tile is None:
        q_tile = _pick_q_tile(T, H)
    assert T % q_tile == 0, "sequence length must be divisible by q_tile"
    if kv_tile is None:
        kv_tile = q_tile
    assert q_tile % kv_tile == 0, "q_tile must be divisible by kv_tile"
    nq = T // q_tile

    def const_spec(shape):
        return pl.BlockSpec(shape, lambda b, i, _n=len(shape): (0,) * _n)

    # ---- prologue: k/v projections at input precision (also the cache outputs).
    k_new, v_new = pl.pallas_call(
        _kv_proj_kernel,
        grid=(B, nq),
        in_specs=[pl.BlockSpec((1, q_tile, dim), lambda b, i: (b, i, 0)),
                  const_spec((dim, D)), const_spec((1, D)),
                  const_spec((dim, D)), const_spec((1, D))],
        out_specs=(pl.BlockSpec((1, q_tile, D), lambda b, i: (b, i, 0)),
                   pl.BlockSpec((1, q_tile, D), lambda b, i: (b, i, 0))),
        out_shape=(jax.ShapeDtypeStruct((B, T, D), x.dtype),
                   jax.ShapeDtypeStruct((B, T, D), x.dtype)),
        compiler_params=pltpu.CompilerParams(
            dimension_semantics=("parallel", "parallel")),
    )(x, wk, bk, wv, bv)

    # ---- fused attention: q proj -> flash softmax over causal kv chunks -> out proj.
    xc = x.astype(cdt)
    wqc, woc = wq.astype(cdt), wo.astype(cdt)
    bqf, bof = bq.astype(jnp.float32), bo.astype(jnp.float32)

    kernel = functools.partial(
        _mqa_attn_kernel, n_heads=H, head_dim=D, q_tile=q_tile, kv_tile=kv_tile,
        approx_recip=(cdt != jnp.dtype(jnp.float32)))

    # Rough VMEM bound (blocks double-buffered) + advisory cost estimate.
    w_bytes = (dim * hd + hd * dim) * cdt.itemsize + (hd + dim) * 4
    blk_bytes = (q_tile * dim * (cdt.itemsize + jnp.dtype(out_dtype).itemsize)
                 + 2 * T * D * jnp.dtype(x.dtype).itemsize)
    live_bytes = 4 * (H * q_tile * (kv_tile + D + 4) + 2 * q_tile * hd)
    vmem_bytes = int(min(max(2 * (2 * blk_bytes + 2 * w_bytes + live_bytes),
                             32 * 2**20), 128 * 2**20))
    flops = int(B * (4 * T * dim * hd + 2 * H * D * T * (T + q_tile)))
    transcendentals = int(B * H * T * (T + q_tile) // 2)
    bytes_accessed = int(B * T * dim * (cdt.itemsize + jnp.dtype(out_dtype).itemsize)
                         + 2 * B * T * D * jnp.dtype(x.dtype).itemsize
                         + 2 * w_bytes)

    out = pl.pallas_call(
        kernel,
        grid=(B, nq),
        in_specs=[
            pl.BlockSpec((1, q_tile, dim), lambda b, qi: (b, qi, 0)),   # x tile
            const_spec((dim, hd)), const_spec((1, hd)),                 # Wq, bq
            pl.BlockSpec((1, T, D), lambda b, qi: (b, 0, 0)),           # k (row)
            pl.BlockSpec((1, T, D), lambda b, qi: (b, 0, 0)),           # v (row)
            const_spec((hd, dim)), const_spec((1, dim)),                # Wo, bo
        ],
        out_specs=pl.BlockSpec((1, q_tile, dim), lambda b, qi: (b, qi, 0)),
        out_shape=jax.ShapeDtypeStruct((B, T, dim), out_dtype),
        compiler_params=pltpu.CompilerParams(
            dimension_semantics=("parallel", "parallel"),
            vmem_limit_bytes=vmem_bytes),
        cost_estimate=pl.CostEstimate(flops=flops,
                                      transcendentals=transcendentals,
                                      bytes_accessed=bytes_accessed),
    )(xc, wqc, bqf, k_new, v_new, woc, bof)

    # Match the PyTorch module outputs: k_cat/v_cat carry a singleton KV-head dim.
    return out, k_new[:, None], v_new[:, None]


# ----------------------------------------------------------------------------
# Plain-JAX reference and init (mirror the PyTorch module, no cache)
# ----------------------------------------------------------------------------
def mqa_reference(x, params, n_heads, head_dim):
    B, T, dim = x.shape
    wq, bq, wk, bk, wv, bv, wo, bo = params
    q = (x @ wq + bq).reshape(B, T, n_heads, head_dim).transpose(0, 2, 1, 3)
    k = (x @ wk + bk)[:, None]     # (B, 1, T, D)
    v = (x @ wv + bv)[:, None]
    prod = jnp.einsum("bhtd,bksd->bhts", q, k) / math.sqrt(head_dim)
    base = jnp.tril(jnp.ones((T, T), jnp.float32))
    mask = jnp.where(base == 0, -jnp.inf, 0.0)
    prod = prod + mask[None, None]
    attn = jax.nn.softmax(prod, axis=-1)
    ctx = jnp.einsum("bhts,bksd->bhtd", attn, v)
    out = ctx.transpose(0, 2, 1, 3).reshape(B, T, n_heads * head_dim) @ wo + bo
    return out, k, v


def init_params(key, dim, n_heads, head_dim):
    """Deterministic nn.Linear-style init: U(-1/sqrt(fan_in), 1/sqrt(fan_in))."""
    hd = n_heads * head_dim
    ks = jax.random.split(key, 8)

    def lin(kw, kb, fan_in, fan_out):
        bound = 1.0 / math.sqrt(fan_in)
        w = jax.random.uniform(kw, (fan_in, fan_out), jnp.float32, -bound, bound)
        b = jax.random.uniform(kb, (1, fan_out), jnp.float32, -bound, bound)
        return w, b

    wq, bq = lin(ks[0], ks[1], dim, hd)
    wk, bk = lin(ks[2], ks[3], dim, head_dim)
    wv, bv = lin(ks[4], ks[5], dim, head_dim)
    wo, bo = lin(ks[6], ks[7], hd, dim)
    return (wq, bq, wk, bk, wv, bv, wo, bo)


if __name__ == "__main__":
    n_heads, head_dim = 4, 8
    key = jax.random.PRNGKey(0)
    kx, kp, kx2 = jax.random.split(key, 3)

    B, T, dim = 2, 8, 32
    x = jax.random.normal(kx, (B, T, dim), jnp.float32)
    params = init_params(kp, dim, n_heads, head_dim)
    ref_out, ref_k, ref_v = mqa_reference(x, params, n_heads, head_dim)

    # Case 1: single query tile, exact f32 compute path.
    out, k_cat, v_cat = mqa_forward(x, params, n_heads, head_dim,
                                    compute_dtype=jnp.float32)
    out = jax.block_until_ready(out)
    np.testing.assert_allclose(np.asarray(out), np.asarray(ref_out), rtol=1e-4, atol=1e-4)
    np.testing.assert_allclose(np.asarray(k_cat), np.asarray(ref_k), rtol=1e-4, atol=1e-4)
    np.testing.assert_allclose(np.asarray(v_cat), np.asarray(ref_v), rtol=1e-4, atol=1e-4)

    # Case 2: multiple query tiles (T=16, TQ=8) -> exercises the unmasked-prefix
    # fori_loop and the causal mask offsets across the grid.
    T2 = 16
    x2 = jax.random.normal(kx2, (B, T2, dim), jnp.float32)
    ref2_out, ref2_k, ref2_v = mqa_reference(x2, params, n_heads, head_dim)
    out2, k2, v2 = mqa_forward(x2, params, n_heads, head_dim, q_tile=8,
                               compute_dtype=jnp.float32)
    out2 = jax.block_until_ready(out2)
    np.testing.assert_allclose(np.asarray(out2), np.asarray(ref2_out), rtol=1e-4, atol=1e-4)
    np.testing.assert_allclose(np.asarray(k2), np.asarray(ref2_k), rtol=1e-4, atol=1e-4)
    np.testing.assert_allclose(np.asarray(v2), np.asarray(ref2_v), rtol=1e-4, atol=1e-4)

    # Case 3: kv_tile < q_tile -> multiple masked diagonal chunks, including
    # rows whose later diagonal chunk is fully masked.
    out3, _, _ = mqa_forward(x2, params, n_heads, head_dim, q_tile=16, kv_tile=8,
                             compute_dtype=jnp.float32)
    out3 = jax.block_until_ready(out3)
    np.testing.assert_allclose(np.asarray(out3), np.asarray(ref2_out), rtol=1e-4, atol=1e-4)

    # Case 4: default bf16 matmul-operand path (f32 accumulation), loose
    # tolerance on out; k_cat/v_cat stay exact (kv projection at input precision).
    out_bf, kbf, vbf = mqa_forward(x, params, n_heads, head_dim)
    out_bf = jax.block_until_ready(out_bf)
    np.testing.assert_allclose(np.asarray(out_bf), np.asarray(ref_out), rtol=5e-2, atol=5e-2)
    np.testing.assert_allclose(np.asarray(kbf), np.asarray(ref_k), rtol=1e-4, atol=1e-4)
    np.testing.assert_allclose(np.asarray(vbf), np.asarray(ref_v), rtol=1e-4, atol=1e-4)

    print("KERNEL_OK")
</pallas_src>

<mosaic_0001>
module attributes {stable_mosaic.version = 11 : i64} {
  func.func @_kv_proj_kernel(%arg0: i32, %arg1: i32, %arg2: memref<1x8x32xf32, #tpu.memory_space<vmem>>, %arg3: memref<32x8xf32, #tpu.memory_space<vmem>>, %arg4: memref<1x8xf32, #tpu.memory_space<vmem>>, %arg5: memref<32x8xf32, #tpu.memory_space<vmem>>, %arg6: memref<1x8xf32, #tpu.memory_space<vmem>>, %arg7: memref<1x8x8xf32, #tpu.memory_space<vmem>>, %arg8: memref<1x8x8xf32, #tpu.memory_space<vmem>>) attributes {dimension_semantics = [#tpu.dimension_semantics<parallel>, #tpu.dimension_semantics<parallel>], iteration_bounds = array<i64: 2, 1>, scalar_prefetch = 0 : i64, scratch_operands = 0 : i64, tpu.core_type = #tpu.core_type<tc>, window_params = [{transform_indices = @transform_0, window_bounds = array<i64: 1, 8, 32>}, {pipeline_mode = #tpu.pipeline_mode<synchronous>, transform_indices = @transform_1, window_bounds = array<i64: 32, 8>}, {pipeline_mode = #tpu.pipeline_mode<synchronous>, transform_indices = @transform_2, window_bounds = array<i64: 1, 8>}, {pipeline_mode = #tpu.pipeline_mode<synchronous>, transform_indices = @transform_3, window_bounds = array<i64: 32, 8>}, {pipeline_mode = #tpu.pipeline_mode<synchronous>, transform_indices = @transform_4, window_bounds = array<i64: 1, 8>}, {transform_indices = @transform_5, window_bounds = array<i64: 1, 8, 8>}, {transform_indices = @transform_6, window_bounds = array<i64: 1, 8, 8>}]} {
    %c0 = arith.constant 0 : index
    %c0_0 = arith.constant 0 : index
    %c0_1 = arith.constant 0 : index
    %0 = vector.load %arg2[%c0, %c0_0, %c0_1] : memref<1x8x32xf32, #tpu.memory_space<vmem>>, vector<1x8x32xf32>
    %1 = vector.shape_cast %0 : vector<1x8x32xf32> to vector<8x32xf32>
    %c0_2 = arith.constant 0 : index
    %c0_3 = arith.constant 0 : index
    %2 = vector.load %arg3[%c0_2, %c0_3] : memref<32x8xf32, #tpu.memory_space<vmem>>, vector<32x8xf32>
    %cst = arith.constant dense<0.000000e+00> : vector<8x8xf32>
    %3 = tpu.matmul %1, %2, %cst {dimension_numbers = #tpu.dot_dimension_numbers<[1], [0], [0], [1], [0, 0, 1, 1], [], []>} : vector<8x32xf32>, vector<32x8xf32>, vector<8x8xf32> -> vector<8x8xf32>
    %c0_4 = arith.constant 0 : index
    %c0_5 = arith.constant 0 : index
    %4 = vector.load %arg4[%c0_4, %c0_5] : memref<1x8xf32, #tpu.memory_space<vmem>>, vector<1x8xf32>
    %5 = vector.broadcast %4 : vector<1x8xf32> to vector<8x8xf32>
    %6 = arith.addf %3, %5 : vector<8x8xf32>
    %c0_6 = arith.constant 0 : index
    %c0_7 = arith.constant 0 : index
    %7 = vector.load %arg5[%c0_6, %c0_7] : memref<32x8xf32, #tpu.memory_space<vmem>>, vector<32x8xf32>
    %cst_8 = arith.constant dense<0.000000e+00> : vector<8x8xf32>
    %8 = tpu.matmul %1, %7, %cst_8 {dimension_numbers = #tpu.dot_dimension_numbers<[1], [0], [0], [1], [0, 0, 1, 1], [], []>} : vector<8x32xf32>, vector<32x8xf32>, vector<8x8xf32> -> vector<8x8xf32>
    %c0_9 = arith.constant 0 : index
    %c0_10 = arith.constant 0 : index
    %9 = vector.load %arg6[%c0_9, %c0_10] : memref<1x8xf32, #tpu.memory_space<vmem>>, vector<1x8xf32>
    %10 = vector.broadcast %9 : vector<1x8xf32> to vector<8x8xf32>
    %11 = arith.addf %8, %10 : vector<8x8xf32>
    %c0_11 = arith.constant 0 : index
    %c0_12 = arith.constant 0 : index
    %c0_13 = arith.constant 0 : index
    %12 = vector.load %arg7[%c0_11, %c0_12, %c0_13] : memref<1x8x8xf32, #tpu.memory_space<vmem>>, vector<1x8x8xf32>
    %13 = vector.shape_cast %12 : vector<1x8x8xf32> to vector<8x8xf32>
    %14 = vector.shape_cast %6 : vector<8x8xf32> to vector<1x8x8xf32>
    tpu.vector_store %arg7[%c0_11, %c0_12, %c0_13], %14 {strides = array<i32>} : memref<1x8x8xf32, #tpu.memory_space<vmem>>, vector<1x8x8xf32>,
    %c0_14 = arith.constant 0 : index
    %c0_15 = arith.constant 0 : index
    %c0_16 = arith.constant 0 : index
    %15 = vector.load %arg8[%c0_14, %c0_15, %c0_16] : memref<1x8x8xf32, #tpu.memory_space<vmem>>, vector<1x8x8xf32>
    %16 = vector.shape_cast %15 : vector<1x8x8xf32> to vector<8x8xf32>
    %17 = vector.shape_cast %11 : vector<8x8xf32> to vector<1x8x8xf32>
    tpu.vector_store %arg8[%c0_14, %c0_15, %c0_16], %17 {strides = array<i32>} : memref<1x8x8xf32, #tpu.memory_space<vmem>>, vector<1x8x8xf32>,
    return
  }
  func.func @transform_0(%arg0: i32, %arg1: i32) -> (i32, i32, i32) {
    %c0_i32 = arith.constant 0 : i32
    %c0_i32_0 = arith.constant 0 : i32
    return %arg0, %arg1, %c0_i32 : i32, i32, i32
  }
  func.func @transform_1(%arg0: i32, %arg1: i32) -> (i32, i32) {
    %c0_i32 = arith.constant 0 : i32
    %c0_i32_0 = arith.constant 0 : i32
    %c0_i32_1 = arith.constant 0 : i32
    return %c0_i32, %c0_i32_0 : i32, i32
  }
  func.func @transform_2(%arg0: i32, %arg1: i32) -> (i32, i32) {
    %c0_i32 = arith.constant 0 : i32
    %c0_i32_0 = arith.constant 0 : i32
    %c0_i32_1 = arith.constant 0 : i32
    return %c0_i32, %c0_i32_0 : i32, i32
  }
  func.func @transform_3(%arg0: i32, %arg1: i32) -> (i32, i32) {
    %c0_i32 = arith.constant 0 : i32
    %c0_i32_0 = arith.constant 0 : i32
    %c0_i32_1 = arith.constant 0 : i32
    return %c0_i32, %c0_i32_0 : i32, i32
  }
  func.func @transform_4(%arg0: i32, %arg1: i32) -> (i32, i32) {
    %c0_i32 = arith.constant 0 : i32
    %c0_i32_0 = arith.constant 0 : i32
    %c0_i32_1 = arith.constant 0 : i32
    return %c0_i32, %c0_i32_0 : i32, i32
  }
  func.func @transform_5(%arg0: i32, %arg1: i32) -> (i32, i32, i32) {
    %c0_i32 = arith.constant 0 : i32
    %c0_i32_0 = arith.constant 0 : i32
    return %arg0, %arg1, %c0_i32 : i32, i32, i32
  }
  func.func @transform_6(%arg0: i32, %arg1: i32) -> (i32, i32, i32) {
    %c0_i32 = arith.constant 0 : i32
    %c0_i32_0 = arith.constant 0 : i32
    return %arg0, %arg1, %c0_i32 : i32, i32, i32
  }
}

</mosaic_0001>

<llo_original>
// kernel: tpu_custom_call.1
$region0: #{tpu_custom_call.1}
  #allocation0 [shape = 'u32[]', space=smem, size = 0x4, offset = 0x4, fixed_abs, tag = 'smem constant byte address 0x4 - core index']
  #allocation1 [shape = 'u32[72,128]{1,0:T(1,128)}', space=vmem, size = 0x9000, scoped, tag = 'internal scratch']
  %s0 = inlined_call_operand.vmem [shape: f32[2,8,32], index: 0, kind: input, shape index: {}]
  %s1 = inlined_call_operand.vmem [shape: f32[32,8], index: 1, kind: input, shape index: {}]
  %s2 = inlined_call_operand.vmem [shape: f32[1,8], index: 2, kind: input, shape index: {}]
  %s3 = inlined_call_operand.vmem [shape: f32[32,8], index: 3, kind: input, shape index: {}]
  %s4 = inlined_call_operand.vmem [shape: f32[1,8], index: 4, kind: input, shape index: {}]
  %s5 = inlined_call_operand.hbm [shape: f32[2,8,8], index: 5, kind: output, shape index: {0}]
  %s6 = inlined_call_operand.hbm [shape: f32[2,8,8], index: 6, kind: output, shape index: {1}]
  %7 = xla_tuple %s5, %s6
  %s8 = sld [smem:[#allocation0]]
  $region61: #{tpu_custom_call.1} parent=0
    _
  %s10 = ssub.s32 1, %s8
  %s11 = scalar_select 0, %s10, %s8
  $region1: #{tpu_custom_call.1} parent=0
    #allocation2 [shape = 'u8[8192]{0}', space=vmem, size = 0x2000, scoped, tag = 'output window, operand 0']
    #allocation3 [shape = 's32[2]{0}', space=sflag, size = 0x8, scoped, tag = 'scoped memory for tpu_custom_call.1']
    #allocation4 [shape = 'u8[8192]{0}', space=vmem, size = 0x2000, scoped, tag = 'output window, operand 1']
    #allocation5 [shape = 's32[2]{0}', space=sflag, size = 0x8, scoped, tag = 'scoped memory for tpu_custom_call.1']
    %12 = vsyncpa [#allocation3], 0
    %s13 = scalar_lea.sflag [#allocation3], 1
    %14 = vsyncpa %s13, 0
    %15 = vsyncpa [#allocation5], 0
    %s16 = scalar_lea.sflag [#allocation5], 1
    %17 = vsyncpa %s16, 0
    loop: start=0, step=1, limit=4
    $region2: #{tpu_custom_call.1} parent=1 // loop_pre_header
      _
    $region3: #{tpu_custom_call.1} parent=1 // loop_header
      %s19 = sphi 0, %s23
      %p20 = scmp.ge.s32.totalorder %s19, 4
      %s26 = sphi 0, %s38
      %s27 = sphi 0, %s34
      %s28 = sphi 0, %s26
      %s29 = sphi 0, %s27
      %s30 = sphi 0, %s28
      %s31 = sphi 0, %s29
      %s43 = sphi 0, %s45
      %s46 = sphi 0, %s43
      %s47 = sphi 0, %s46
      %s63 = sphi 0, %s47
      %s67 = sphi 0, %s67
      %s69 = sphi 0, %s67
      %s70 = sphi 0, %s69
      %s84 = sphi 0, %s70
      %s88 = sphi 0, %s88
      %s90 = sphi 0, %s88
      %s91 = sphi 0, %s90
      %s105 = sphi 0, %s91
      %s109 = sphi 0, %s109
      %s111 = sphi 0, %s109
      %s112 = sphi 0, %s111
      %s126 = sphi 0, %s112
      %s130 = sphi 0, %s130
      %s132 = sphi 0, %s130
      %s133 = sphi 0, %s132
      %s147 = sphi 0, %s133
      %s155 = sphi 0, %s157
      %s158 = sphi 0, %s155
      %s159 = sphi 0, %s158
      %s175 = sphi 0, %s159
      %s183 = sphi 0, %s185
      %s186 = sphi 0, %s183
      %s187 = sphi 0, %s186
      %s203 = sphi 0, %s187
    $region4: #{tpu_custom_call.1} parent=1 // loop_header_branch
      %22 = sbr.rel (%p20) target = $region8
    $region5: #{tpu_custom_call.1} parent=1 // loop_body
      %s24 = ssub.s32 %s19, 1
      %s25 = ssub.s32 %s19, 2
      %s32 = sadd.s32 1, %s27
      %p33 = scmp.ge.s32.totalorder %s32, 1
      %s34 = scalar_select %p33, 0, %s32
      %s35 = sadd.s32 1, %s26
      %s36 = scalar_select %p33, %s35, %s26
      %p37 = scmp.ge.s32.totalorder %s36, 2
      %s38 = scalar_select %p37, 0, %s36
      %s39 = ssub.s32 %s26, %s38
      %s40 = ssub.s32 %s27, %s34
      %s41 = sor.u32 %s39, %s40
      %p42 = scmp.eq.s32.totalorder %s41, 0
      %s44 = sadd.s32 %s43, 1
      %s45 = scalar_select %p42, %s43, %s44
      %p48 = pneg %p42
      %p49 = scmp.eq.s32.totalorder %s19, 1
      %p50 = por %p48, %p49
      %p51 = scmp.ne.s32.totalorder %s43, %s46
      %p52 = scmp.eq.s32.totalorder %s19, 0
      %p53 = por %p51, %p52
      %p54 = scmp.ne.s32.totalorder %s43, %s46
      %p55 = scmp.eq.s32.totalorder %s24, 1
      %p56 = por %p54, %p55
      %p57 = scmp.ne.s32.totalorder %s46, %s47
      %p58 = scmp.eq.s32.totalorder %s24, 0
      %p59 = por %p57, %p58
      %p60 = scmp.ne.s32.totalorder %s46, %s47
      %p61 = scmp.eq.s32.totalorder %s25, 1
      %p62 = por %p60, %p61
      %p64 = scmp.ne.s32.totalorder %s47, %s63
      %p65 = scmp.eq.s32.totalorder %s25, 0
      %p66 = por %p64, %p65
      %s68 = sadd.s32 %s67, 1
      %p71 = scmp.eq.s32.totalorder %s19, 1
      %p72 = scmp.ne.s32.totalorder %s67, %s69
      %p73 = scmp.eq.s32.totalorder %s19, 0
      %p74 = por %p72, %p73
      %p75 = scmp.ne.s32.totalorder %s67, %s69
      %p76 = scmp.eq.s32.totalorder %s24, 1
      %p77 = por %p75, %p76
      %p78 = scmp.ne.s32.totalorder %s69, %s70
      %p79 = scmp.eq.s32.totalorder %s24, 0
      %p80 = por %p78, %p79
      %p81 = scmp.ne.s32.totalorder %s69, %s70
      %p82 = scmp.eq.s32.totalorder %s25, 1
      %p83 = por %p81, %p82
      %p85 = scmp.ne.s32.totalorder %s70, %s84
      %p86 = scmp.eq.s32.totalorder %s25, 0
      %p87 = por %p85, %p86
      %s89 = sadd.s32 %s88, 1
      %p92 = scmp.eq.s32.totalorder %s19, 1
      %p93 = scmp.ne.s32.totalorder %s88, %s90
      %p94 = scmp.eq.s32.totalorder %s19, 0
      %p95 = por %p93, %p94
      %p96 = scmp.ne.s32.totalorder %s88, %s90
      %p97 = scmp.eq.s32.totalorder %s24, 1
      %p98 = por %p96, %p97
      %p99 = scmp.ne.s32.totalorder %s90, %s91
      %p100 = scmp.eq.s32.totalorder %s24, 0
      %p101 = por %p99, %p100
      %p102 = scmp.ne.s32.totalorder %s90, %s91
      %p103 = scmp.eq.s32.totalorder %s25, 1
      %p104 = por %p102, %p103
      %p106 = scmp.ne.s32.totalorder %s91, %s105
      %p107 = scmp.eq.s32.totalorder %s25, 0
      %p108 = por %p106, %p107
      %s110 = sadd.s32 %s109, 1
      %p113 = scmp.eq.s32.totalorder %s19, 1
      %p114 = scmp.ne.s32.totalorder %s109, %s111
      %p115 = scmp.eq.s32.totalorder %s19, 0
      %p116 = por %p114, %p115
      %p117 = scmp.ne.s32.totalorder %s109, %s111
      %p118 = scmp.eq.s32.totalorder %s24, 1
      %p119 = por %p117, %p118
      %p120 = scmp.ne.s32.totalorder %s111, %s112
      %p121 = scmp.eq.s32.totalorder %s24, 0
      %p122 = por %p120, %p121
      %p123 = scmp.ne.s32.totalorder %s111, %s112
      %p124 = scmp.eq.s32.totalorder %s25, 1
      %p125 = por %p123, %p124
      %p127 = scmp.ne.s32.totalorder %s112, %s126
      %p128 = scmp.eq.s32.totalorder %s25, 0
      %p129 = por %p127, %p128
      %s131 = sadd.s32 %s130, 1
      %p134 = scmp.eq.s32.totalorder %s19, 1
      %p135 = scmp.ne.s32.totalorder %s130, %s132
      %p136 = scmp.eq.s32.totalorder %s19, 0
      %p137 = por %p135, %p136
      %p138 = scmp.ne.s32.totalorder %s130, %s132
      %p139 = scmp.eq.s32.totalorder %s24, 1
      %p140 = por %p138, %p139
      %p141 = scmp.ne.s32.totalorder %s132, %s133
      %p142 = scmp.eq.s32.totalorder %s24, 0
      %p143 = por %p141, %p142
      %p144 = scmp.ne.s32.totalorder %s132, %s133
      %p145 = scmp.eq.s32.totalorder %s25, 1
      %p146 = por %p144, %p145
      %p148 = scmp.ne.s32.totalorder %s133, %s147
      %p149 = scmp.eq.s32.totalorder %s25, 0
      %p150 = por %p148, %p149
      %s151 = ssub.s32 %s26, %s38
      %s152 = ssub.s32 %s27, %s34
      %s153 = sor.u32 %s151, %s152
      %p154 = scmp.eq.s32.totalorder %s153, 0
      %s156 = sadd.s32 %s155, 1
      %s157 = scalar_select %p154, %s155, %s156
      %p160 = pneg %p154
      %p161 = scmp.eq.s32.totalorder %s19, 1
      %p162 = por %p160, %p161
      %p163 = scmp.ne.s32.totalorder %s155, %s158
      %p164 = scmp.eq.s32.totalorder %s19, 0
      %p165 = por %p163, %p164
      %p166 = scmp.ne.s32.totalorder %s155, %s158
      %p167 = scmp.eq.s32.totalorder %s24, 1
      %p168 = por %p166, %p167
      %p169 = scmp.ne.s32.totalorder %s158, %s159
      %p170 = scmp.eq.s32.totalorder %s24, 0
      %p171 = por %p169, %p170
      %p172 = scmp.ne.s32.totalorder %s158, %s159
      %p173 = scmp.eq.s32.totalorder %s25, 1
      %p174 = por %p172, %p173
      %p176 = scmp.ne.s32.totalorder %s159, %s175
      %p177 = scmp.eq.s32.totalorder %s25, 0
      %p178 = por %p176, %p177
      %s179 = ssub.s32 %s26, %s38
      %s180 = ssub.s32 %s27, %s34
      %s181 = sor.u32 %s179, %s180
      %p182 = scmp.eq.s32.totalorder %s181, 0
      %s184 = sadd.s32 %s183, 1
      %s185 = scalar_select %p182, %s183, %s184
      %p188 = pneg %p182
      %p189 = scmp.eq.s32.totalorder %s19, 1
      %p190 = por %p188, %p189
      %p191 = scmp.ne.s32.totalorder %s183, %s186
      %p192 = scmp.eq.s32.totalorder %s19, 0
      %p193 = por %p191, %p192
      %p194 = scmp.ne.s32.totalorder %s183, %s186
      %p195 = scmp.eq.s32.totalorder %s24, 1
      %p196 = por %p194, %p195
      %p197 = scmp.ne.s32.totalorder %s186, %s187
      %p198 = scmp.eq.s32.totalorder %s24, 0
      %p199 = por %p197, %p198
      %p200 = scmp.ne.s32.totalorder %s186, %s187
      %p201 = scmp.eq.s32.totalorder %s25, 1
      %p202 = por %p200, %p201
      %p204 = scmp.ne.s32.totalorder %s187, %s203
      %p205 = scmp.eq.s32.totalorder %s25, 0
      %p206 = por %p204, %p205
      %p207 = scmp.le.s32.totalorder 1, %s19
      %p208 = scmp.lt.s32.totalorder %s19, 3
      %p209 = pnand %p207, %p208
      %p210 = pneg %p209
      // Predicated region
      $region9: #{tpu_custom_call.1} parent=5 // pred_check
        _
      $region10: #{tpu_custom_call.1} parent=5 // pred_check_branch
        %212 = sbr.rel (%p209) target = $region12
      $region11: #{tpu_custom_call.1} parent=5 // pred_region
        %s213 = ssub.s32 %s19, 1
        // Predicated region
        $region13: #{tpu_custom_call.1} parent=11 // pred_check
          %p214 = pneg %p80
        $region14: #{tpu_custom_call.1} parent=11 // pred_check_branch
          %216 = sbr.rel (%p214) target = $region16
        $region15: #{tpu_custom_call.1} parent=11 // pred_region
          _
        $region16: #{tpu_custom_call.1} parent=11 // pred_fallthru
          _
        // Predicated region
        $region17: #{tpu_custom_call.1} parent=11 // pred_check
          %p217 = pneg %p101
        $region18: #{tpu_custom_call.1} parent=11 // pred_check_branch
          %219 = sbr.rel (%p217) target = $region20
        $region19: #{tpu_custom_call.1} parent=11 // pred_region
          _
        $region20: #{tpu_custom_call.1} parent=11 // pred_fallthru
          _
        // Predicated region
        $region21: #{tpu_custom_call.1} parent=11 // pred_check
          %p220 = pneg %p122
        $region22: #{tpu_custom_call.1} parent=11 // pred_check_branch
          %222 = sbr.rel (%p220) target = $region24
        $region23: #{tpu_custom_call.1} parent=11 // pred_region
          _
        $region24: #{tpu_custom_call.1} parent=11 // pred_fallthru
          _
        // Predicated region
        $region25: #{tpu_custom_call.1} parent=11 // pred_check
          %p223 = pneg %p143
        $region26: #{tpu_custom_call.1} parent=11 // pred_check_branch
          %225 = sbr.rel (%p223) target = $region28
        $region27: #{tpu_custom_call.1} parent=11 // pred_region
          _
        $region28: #{tpu_custom_call.1} parent=11 // pred_fallthru
          _
      $region12: #{tpu_custom_call.1} parent=5 // pred_fallthru
        _
      %p226 = scmp.lt.s32.totalorder %s19, 2
      // Predicated region
      $region29: #{tpu_custom_call.1} parent=5 // pred_check
        %p227 = pneg %p226
      $region30: #{tpu_custom_call.1} parent=5 // pred_check_branch
        %229 = sbr.rel (%p227) target = $region32
      $region31: #{tpu_custom_call.1} parent=5 // pred_region
        // Predicated region
        $region33: #{tpu_custom_call.1} parent=31 // pred_check
          %p230 = pneg %p53
        $region34: #{tpu_custom_call.1} parent=31 // pred_check_branch
          %232 = sbr.rel (%p230) target = $region36
        $region35: #{tpu_custom_call.1} parent=31 // pred_region
          %p233 = scmp.lt.s32.totalorder %s26, 1
          %s234 = scalar_select %p233, %s26, 1
          %p235 = scmp.lt.s32.totalorder %s27, 0
          %s236 = scalar_select %p235, %s27, 0
          %s237 = sadd.s32 %s236, %s234
          %s238 = smul.addr %s237, 8
          %s239 = scalar_lea.vmem %s0, %s238
        $region36: #{tpu_custom_call.1} parent=31 // pred_fallthru
          _
      $region32: #{tpu_custom_call.1} parent=5 // pred_fallthru
        _
      %p240 = scmp.le.s32.totalorder 1, %s19
      %p241 = scmp.lt.s32.totalorder %s19, 3
      %p242 = pnand %p240, %p241
      %p243 = pneg %p242
      // Predicated region
      $region37: #{tpu_custom_call.1} parent=5 // pred_check
        _
      $region38: #{tpu_custom_call.1} parent=5 // pred_check_branch
        %245 = sbr.rel (%p242) target = $region40
      $region39: #{tpu_custom_call.1} parent=5 // pred_region
        %s246 = ssub.s32 %s19, 1
        %p247 = scmp.lt.s32.totalorder %s28, 1
        %s248 = scalar_select %p247, %s28, 1
        %p249 = scmp.lt.s32.totalorder %s29, 0
        %s250 = scalar_select %p249, %s29, 0
        %s251 = sadd.s32 %s250, %s248
        %s252 = smul.addr %s251, 8
        %s253 = scalar_lea.vmem %s0, %s252
        %p254 = pneg %p59
        %p255 = pneg %p56
        %p256 = pneg %p80
        %p257 = pneg %p77
        %p258 = pneg %p101
        %p259 = pneg %p98
        %p260 = pneg %p122
        %p261 = pneg %p119
        %p262 = pneg %p143
        %p263 = pneg %p140
        %p264 = pneg %p171
        %p265 = pneg %p168
        %s266 = sand.u32 %s158, 1
        %s267 = scalar_lea.sflag [#allocation3], %s266
        %s268 = sand.u32 %s158, 1
        %s269 = smul.addr %s268, 8
        %s270 = scalar_lea.vmem [#allocation2], %s269
        %p271 = pneg %p199
        %p272 = pneg %p196
        %s273 = sand.u32 %s186, 1
        %s274 = scalar_lea.sflag [#allocation5], %s273
        %s275 = sand.u32 %s186, 1
        %s276 = smul.addr %s275, 8
        %s277 = scalar_lea.vmem [#allocation4], %s276
        %p278 = scmp.lt.s32.totalorder %s28, 1
        %s279 = scalar_select %p278, %s28, 1
        %p280 = scmp.lt.s32.totalorder %s29, 0
        %s281 = scalar_select %p280, %s29, 0
        %s282 = sadd.s32 %s281, %s279
        %s283 = smul.addr %s282, 8
        %s284 = scalar_lea.vmem %s0, %s283
        %v285 = vld [vmem:[%s284] sm:$0xff]
        %v286 = vld [vmem:[%s1] sm:$0xff]
        %v287 = vld [vmem:[%s1 + $0x8] sm:$0xff]
        %v288 = vld [vmem:[%s1 + $0x10] sm:$0xff]
        %v289 = vld [vmem:[%s1 + $0x18] sm:$0xff]
        %v290 = vld [vmem:[%s2] sm:$0x1]
        %v292 = vperm.slane %v290, 0
        %vm294 = vcmask 261120
        %v296 = vsel %vm294, %v285, 0
        %298 = vmatpush.msra.mxu0 0.0
        %299 = vmatpush.msra.mxu0 0.0
        %300 = vmatpush.msra.mxu0 0.0
        %301 = vmatpush.msra.mxu0 0.0
        %302 = vmatpush.msra.mxu0 0.0
        %303 = vmatpush.msra.mxu0 0.0
        %304 = vmatpush.msra.mxu0 0.0
        %305 = vmatpush.msra.mxu0 0.0
        %306 = vmatpush.msra.mxu0 0.0
        %307 = vmatpush.msra.mxu0 0.0
        %308 = vmatpush.msra.mxu0 0.0
        %309 = vmatpush.msra.mxu0 0.0
        %310 = vmatpush.msra.mxu0 %v289
        %311 = vmatpush.msra.mxu0 %v288
        %312 = vmatpush.msra.mxu0 %v287
        %313 = vmatpush.msra.mxu0 %v286
        %314 = vmatmul.f32.gmra.mxu0 %v296
        %v315 = vpop.f32.mrf.mxu0
        %v316 = vadd.f32 %v292, %v315
        %317 = vdwg.mxu0
        %v318 = vld [vmem:[%s3] sm:$0xff]
        %v319 = vld [vmem:[%s3 + $0x8] sm:$0xff]
        %v320 = vld [vmem:[%s3 + $0x10] sm:$0xff]
        %v321 = vld [vmem:[%s3 + $0x18] sm:$0xff]
        %v322 = vld [vmem:[%s4] sm:$0x1]
        %v324 = vperm.slane %v322, 0
        %326 = vmatpush.msra.mxu0 0.0
        %327 = vmatpush.msra.mxu0 0.0
        %328 = vmatpush.msra.mxu0 0.0
        %329 = vmatpush.msra.mxu0 0.0
        %330 = vmatpush.msra.mxu0 0.0
        %331 = vmatpush.msra.mxu0 0.0
        %332 = vmatpush.msra.mxu0 0.0
        %333 = vmatpush.msra.mxu0 0.0
        %334 = vmatpush.msra.mxu0 0.0
        %335 = vmatpush.msra.mxu0 0.0
        %336 = vmatpush.msra.mxu0 0.0
        %337 = vmatpush.msra.mxu0 0.0
        %338 = vmatpush.msra.mxu0 %v321
        %339 = vmatpush.msra.mxu0 %v320
        %340 = vmatpush.msra.mxu0 %v319
        %341 = vmatpush.msra.mxu0 %v318
        %342 = vmatmul.f32.gmra.mxu0 %v296
        %v343 = vpop.f32.mrf.mxu0
        %v344 = vadd.f32 %v324, %v343
        %345 = vdwg.mxu0
        %vm346 = vcmask 64512
        %347 = vst.msk [vmem:[%s270] sm:$0xff] %vm346, %v316
        %348 = vst.msk [vmem:[%s277] sm:$0xff] %vm346, %v344
        %s349 = sand.u32 %s158, 1
        %s350 = scalar_lea.sflag [#allocation3], %s349
        %s351 = sand.u32 %s158, 1
        %s352 = smul.addr %s351, 8
        %s353 = scalar_lea.vmem [#allocation2], %s352
        %s354 = sand.u32 %s186, 1
        %s355 = scalar_lea.sflag [#allocation5], %s354
        %s356 = sand.u32 %s186, 1
        %s357 = smul.addr %s356, 8
        %s358 = scalar_lea.vmem [#allocation4], %s357
        // Predicated region
        $region41: #{tpu_custom_call.1} parent=39 // pred_check
          %p359 = pneg %p168
        $region42: #{tpu_custom_call.1} parent=39 // pred_check_branch
          %361 = sbr.rel (%p359) target = $region44
        $region43: #{tpu_custom_call.1} parent=39 // pred_region
          %363 = vsyncadd %s350, 0
          %s364 = sadd.s32 %s29, %s28
          %s365 = smul.addr %s364, 8
          %s366 = scalar_lea.hbm %s5, %s365
          %s368 = sshll.u32 %s353, 4
          %s369 = int_to_ptr.vmem [resolvable:$true] %s368
          %s370 = sshll.u32 %s366, 4
          %s371 = int_to_ptr.hbm [resolvable:$true] %s370
          %373 = dma.vmem_to_hbm [thread:$0]  %s369, 128, %s371, %s350
        $region44: #{tpu_custom_call.1} parent=39 // pred_fallthru
          _
        // Predicated region
        $region45: #{tpu_custom_call.1} parent=39 // pred_check
          %p374 = pneg %p196
        $region46: #{tpu_custom_call.1} parent=39 // pred_check_branch
          %376 = sbr.rel (%p374) target = $region48
        $region47: #{tpu_custom_call.1} parent=39 // pred_region
          %378 = vsyncadd %s355, 0
          %s379 = sadd.s32 %s29, %s28
          %s380 = smul.addr %s379, 8
          %s381 = scalar_lea.hbm %s6, %s380
          %s383 = sshll.u32 %s358, 4
          %s384 = int_to_ptr.vmem [resolvable:$true] %s383
          %s385 = sshll.u32 %s381, 4
          %s386 = int_to_ptr.hbm [resolvable:$true] %s385
          %388 = dma.vmem_to_hbm [thread:$0]  %s384, 128, %s386, %s355
        $region48: #{tpu_custom_call.1} parent=39 // pred_fallthru
          _
      $region40: #{tpu_custom_call.1} parent=5 // pred_fallthru
        _
      %p389 = scmp.le.s32.totalorder 2, %s19
      // Predicated region
      $region49: #{tpu_custom_call.1} parent=5 // pred_check
        %p390 = pneg %p389
      $region50: #{tpu_custom_call.1} parent=5 // pred_check_branch
        %392 = sbr.rel (%p390) target = $region52
      $region51: #{tpu_custom_call.1} parent=5 // pred_region
        %s393 = ssub.s32 %s19, 2
        // Predicated region
        $region53: #{tpu_custom_call.1} parent=51 // pred_check
          %p394 = pneg %p174
        $region54: #{tpu_custom_call.1} parent=51 // pred_check_branch
          %396 = sbr.rel (%p394) target = $region56
        $region55: #{tpu_custom_call.1} parent=51 // pred_region
          %s397 = sand.u32 %s159, 1
          %s398 = scalar_lea.sflag [#allocation3], %s397
          %s399 = sand.u32 %s159, 1
          %s400 = smul.addr %s399, 8
          %s401 = scalar_lea.vmem [#allocation2], %s400
          %403 = dma.done %s398, 128
        $region56: #{tpu_custom_call.1} parent=51 // pred_fallthru
          _
        // Predicated region
        $region57: #{tpu_custom_call.1} parent=51 // pred_check
          %p404 = pneg %p202
        $region58: #{tpu_custom_call.1} parent=51 // pred_check_branch
          %406 = sbr.rel (%p404) target = $region60
        $region59: #{tpu_custom_call.1} parent=51 // pred_region
          %s407 = sand.u32 %s187, 1
          %s408 = scalar_lea.sflag [#allocation5], %s407
          %s409 = sand.u32 %s187, 1
          %s410 = smul.addr %s409, 8
          %s411 = scalar_lea.vmem [#allocation4], %s410
          %413 = dma.done %s408, 128
        $region60: #{tpu_custom_call.1} parent=51 // pred_fallthru
          _
      $region52: #{tpu_custom_call.1} parent=5 // pred_fallthru
        _
    $region6: #{tpu_custom_call.1} parent=1 // loop_footer
      %s23 = sadd.s32 1, %s19
    $region7: #{tpu_custom_call.1} parent=1 // loop_footer_branch
      %18 = sbr.rel target = $region3
    $region8: #{tpu_custom_call.1} parent=1 // loop_exit
      _
    %414 = vsyncpa [#allocation3], 1
    %s415 = scalar_lea.sflag [#allocation3], 1
    %416 = vsyncpa %s415, 1
    %417 = vsyncpa [#allocation5], 1
    %s418 = scalar_lea.sflag [#allocation5], 1
    %419 = vsyncpa %s418, 1

</llo_original>
